<compile_context>
chip_gen: v7x
topology: tpu7x:2x2x1
jax: 0.10.0
libtpu: 0.0.40
codegen_flags: <defaults>
</compile_context>

<pallas_src>
import functools

import jax
import jax.numpy as jnp
from jax.experimental import pallas as pl
from jax.experimental.pallas import tpu as pltpu


def _attn_decoder_kernel(hidden_ref, mask_ref, w1t_ref, b1_ref, w2_ref,
                         wout_ref, bout_ref, attn_ref, pred_ref, *, bf16_eup):
    hidden = hidden_ref[...]                                   # [TB, Sp, H] f32
    TB, Sp, H = hidden.shape

    # --- additive (tanh) attention scores --------------------------------
    # bf16 cast happens here on the VPU (free slot) so the HBM read of the
    # dominant tensor stays a single f32 pass.  MXU matmul, f32 accumulate;
    # W1 is pre-transposed in the wrapper so no in-kernel transpose is needed.
    hidden_bf16 = hidden.astype(jnp.bfloat16)
    proj = jnp.dot(hidden_bf16.reshape(TB * Sp, H), w1t_ref[...],
                   preferred_element_type=jnp.float32)         # [TB*Sp, H] f32
    act = proj + b1_ref[...]
    if bf16_eup:
        # v6e/v7x: bf16 EUP packs 2x elements per push (~2x tanh throughput).
        act = jnp.tanh(act.astype(jnp.bfloat16)).astype(jnp.float32)
    else:
        act = jnp.tanh(act)                                    # v5e: f32 EUP only

    # N=1 projection kept off the MXU: VPU multiply + lane (XLU) reduce.
    act = act.reshape(TB, Sp, H)
    scores = jnp.sum(act * w2_ref[...].reshape(1, 1, H), axis=-1)   # [TB, Sp] f32

    # --- masked softmax over the sequence axis ----------------------------
    mask = mask_ref[...]                                       # 1.0 => masked out
    scores = jnp.where(mask > 0.5, jnp.float32(-1e30), scores)
    m = jnp.max(scores, axis=-1, keepdims=True)
    e = jnp.exp(scores - m)
    denom = jnp.sum(e, axis=-1, keepdims=True)
    attn = e * pl.reciprocal(denom, approx=True)               # [TB, Sp]
    attn_ref[...] = attn

    # --- context: attn-weighted sum of hidden states -----------------------
    # Pure-VPU f32 multiply + seq-axis reduce: avoids TB tiny M=1 MXU matmuls
    # (MXU has slack here, VALU does not bind) and keeps context in f32.
    context = jnp.sum(attn[:, :, None] * hidden, axis=1)       # [TB, H] f32

    # --- decode: linear_1 --------------------------------------------------
    O = pred_ref.shape[-1]
    if O == 1:
        # output_size == 1: keep it off the MXU (VPU mul + lane reduce).
        pred = jnp.sum(context * wout_ref[...], axis=-1, keepdims=True)
    else:
        # general case: explicit contracting dims, no in-kernel transpose.
        pred = jax.lax.dot_general(context, wout_ref[...],
                                   (((1,), (1,)), ((), ())),
                                   preferred_element_type=jnp.float32)
    pred_ref[...] = pred + bout_ref[...]


def _chip_defaults():
    """Chip-aware knobs: VMEM tile budget, scoped VMEM limit, bf16 EUP."""
    kind = ""
    try:
        kind = jax.devices()[0].device_kind.lower()
    except Exception:
        pass
    if "v7" in kind:
        # 64 MiB physical VMEM, 2 TensorCores: stay well under half.
        return {"budget": 20 << 20, "vmem_limit": 48 << 20, "bf16_eup": True}
    if "v6" in kind:
        return {"budget": 24 << 20, "vmem_limit": 64 << 20, "bf16_eup": True}
    if "v5" in kind:
        return {"budget": 16 << 20, "vmem_limit": 64 << 20, "bf16_eup": False}
    # Unknown backend (e.g. interpret mode): be conservative.
    return {"budget": 16 << 20, "vmem_limit": None, "bf16_eup": False}


def _pick_batch_tile(batch, s_pad, hidden_size, budget_bytes):
    """Largest 8-aligned divisor of `batch` whose resident VMEM fits the budget.

    Size model: the f32 hidden tile is the only large double-buffered operand;
    intermediates (bf16 copy, f32 proj/tanh) live once and are lane-padded to
    max(H, 128).  Never silently exceeds the budget with a full-batch fallback.
    """
    lanes = 128
    h_lanes = hidden_size if hidden_size % lanes == 0 else \
        ((hidden_size + lanes - 1) // lanes) * lanes
    s_lanes = s_pad if s_pad % lanes == 0 else \
        ((s_pad + lanes - 1) // lanes) * lanes
    per_row = (
        s_pad * hidden_size * 4 * 2      # f32 hidden tile, double-buffered input
        + s_pad * hidden_size * 2        # in-kernel bf16 copy for the MXU
        + 2 * s_pad * h_lanes * 4        # proj / tanh f32 intermediates (lane-padded)
        + 3 * s_lanes * 4 * 2            # mask in + attn out (dbl-buffered) + scores
    )
    cap = max(1, budget_bytes // per_row)

    divs = [d for d in range(8, batch + 1, 8) if batch % d == 0]
    fits = [d for d in divs if d <= cap]
    if fits:
        tb = max(fits)
    elif batch <= cap:
        tb = batch                       # small batch, whole-batch block is legal
    elif divs:
        tb = min(divs)                   # bound VMEM even if over the soft budget
    else:
        tb = batch                       # no 8-aligned divisor: only legal tile

    # Keep at least 2 grid steps when cheaply possible so the "parallel" batch
    # axis can shard across both TensorCores on v7x.
    if tb == batch and batch >= 16:
        half = batch // 2
        if half % 8 == 0 and batch % half == 0:
            tb = half
    return tb


def attn_decoder_forward(hidden, masks, params, *, batch_tile=None):
    """AttnDecoder forward. Returns (attn [B, S] f32, predict [B, O] f32)."""
    B, S, H = hidden.shape
    O = params["w_out"].shape[0]
    cfg = _chip_defaults()

    # Sublane-align the sequence axis only when needed (avoids an extra HBM
    # pass over `hidden` when S is already a multiple of 8).  Padded positions
    # get mask = 1.0 so they receive exactly zero attention.
    S_pad = ((S + 7) // 8) * 8
    if S_pad != S:
        hidden_in = jnp.pad(hidden.astype(jnp.float32),
                            ((0, 0), (0, S_pad - S), (0, 0)))
        masks_in = jnp.pad(masks.astype(jnp.float32),
                           ((0, 0), (0, S_pad - S)), constant_values=1.0)
    else:
        hidden_in = hidden.astype(jnp.float32)
        masks_in = masks.astype(jnp.float32)

    # Weight prep outside the kernel (done once by XLA, not per grid step).
    w1_t = params["w1"].T.astype(jnp.bfloat16)                 # [H_in, H_out]
    b1 = params["b1"].astype(jnp.float32).reshape(1, H)
    w2 = params["w2"].astype(jnp.float32).reshape(1, H)
    w_out = params["w_out"].astype(jnp.float32).reshape(O, H)
    b_out = params["b_out"].astype(jnp.float32).reshape(1, O)

    TB = batch_tile if batch_tile is not None else \
        _pick_batch_tile(B, S_pad, H, cfg["budget"])
    assert B % TB == 0, "batch_tile must divide the batch size"
    grid = (B // TB,)

    flops = int(2 * B * S_pad * H * H + 4 * B * S_pad * H + 2 * B * H * O)
    transcendentals = int(B * S_pad * (H + 1))
    bytes_accessed = int(B * S_pad * H * 4 + 2 * B * S_pad * 4 + B * O * 4
                         + H * H * 2 + 3 * H * 4 + O * H * 4 + O * 4)

    kernel = functools.partial(_attn_decoder_kernel, bf16_eup=cfg["bf16_eup"])

    attn_p, pred = pl.pallas_call(
        kernel,
        out_shape=(
            jax.ShapeDtypeStruct((B, S_pad), jnp.float32),
            jax.ShapeDtypeStruct((B, O), jnp.float32),
        ),
        grid=grid,
        in_specs=[
            pl.BlockSpec((TB, S_pad, H), lambda b: (b, 0, 0)),   # hidden tile (f32)
            pl.BlockSpec((TB, S_pad), lambda b: (b, 0)),         # mask tile
            pl.BlockSpec((H, H), lambda b: (0, 0)),              # W1^T (resident)
            pl.BlockSpec((1, H), lambda b: (0, 0)),              # b1
            pl.BlockSpec((1, H), lambda b: (0, 0)),              # w2
            pl.BlockSpec((O, H), lambda b: (0, 0)),              # W_out
            pl.BlockSpec((1, O), lambda b: (0, 0)),              # b_out
        ],
        out_specs=(
            pl.BlockSpec((TB, S_pad), lambda b: (b, 0)),         # attention
            pl.BlockSpec((TB, O), lambda b: (b, 0)),             # predict
        ),
        compiler_params=pltpu.CompilerParams(
            dimension_semantics=("parallel",),
            vmem_limit_bytes=cfg["vmem_limit"]),
        cost_estimate=pl.CostEstimate(
            flops=flops, transcendentals=transcendentals,
            bytes_accessed=bytes_accessed),
    )(hidden_in, masks_in, w1_t, b1, w2, w_out, b_out)

    return attn_p[:, :S], pred


def _reference_forward(hidden, masks, params):
    """Pure-JAX f32 reference mirroring the PyTorch module."""
    H = hidden.shape[-1]
    proj = jnp.tanh(hidden @ params["w1"].T + params["b1"])          # [B,S,H]
    scores = (proj @ params["w2"].reshape(H, 1))[..., 0]             # [B,S]
    scores = jnp.where(masks > 0.5, -1e30, scores)
    attn = jax.nn.softmax(scores, axis=-1)
    context = jnp.sum(attn[:, :, None] * hidden, axis=1)             # [B,H]
    pred = context @ params["w_out"].T + params["b_out"]             # [B,O]
    return attn, pred


if __name__ == "__main__":
    B, S, H, O = 16, 8, 32, 1   # batch, seq, hidden_size, output_size

    key = jax.random.PRNGKey(0)
    k_h, k_w1, k_b1, k_w2, k_wo, k_bo = jax.random.split(key, 6)

    hidden = jax.random.normal(k_h, (B, S, H), dtype=jnp.float32)

    # masks: 1.0 marks padding positions (masked out of the softmax);
    # every row keeps at least one valid token.
    lengths = (jnp.arange(B, dtype=jnp.int32) % S) + 1
    masks = (jnp.arange(S)[None, :] >= lengths[:, None]).astype(jnp.float32)

    params = {
        "w1":    jax.random.normal(k_w1, (H, H), dtype=jnp.float32) * 0.1,
        "b1":    jax.random.normal(k_b1, (H,),   dtype=jnp.float32) * 0.1,
        "w2":    jax.random.normal(k_w2, (1, H), dtype=jnp.float32) * 0.1,
        "w_out": jax.random.normal(k_wo, (O, H), dtype=jnp.float32) * 0.1,
        "b_out": jax.random.normal(k_bo, (O,),   dtype=jnp.float32) * 0.1,
    }

    # batch_tile=8 -> grid=(2,): exercises the pipelined grid + 2-TC sharding.
    attn, pred = attn_decoder_forward(hidden, masks, params, batch_tile=8)
    attn, pred = jax.block_until_ready((attn, pred))

    ref_attn, ref_pred = _reference_forward(hidden, masks, params)
    # Tolerance: the W1 matmul runs with bf16 inputs (f32 accumulate), tanh may
    # run in bf16 on v6e/v7x, and softmax uses the approx EUP reciprocal.
    assert attn.shape == (B, S) and pred.shape == (B, O)
    assert jnp.allclose(attn, ref_attn, atol=2e-2, rtol=2e-2), "attention mismatch"
    assert jnp.allclose(pred, ref_pred, atol=2e-2, rtol=2e-2), "prediction mismatch"
    # attention mass on padded positions must be ~0
    assert jnp.all(jnp.where(masks > 0.5, attn, 0.0) < 1e-6)

    print("KERNEL_OK")
</pallas_src>

<mosaic_0001>
module attributes {stable_mosaic.version = 11 : i64} {
  func.func @_attn_decoder_kernel(%arg0: i32, %arg1: memref<8x8x32xf32, #tpu.memory_space<vmem>>, %arg2: memref<8x8xf32, #tpu.memory_space<vmem>>, %arg3: memref<32x32xbf16, #tpu.memory_space<vmem>>, %arg4: memref<1x32xf32, #tpu.memory_space<vmem>>, %arg5: memref<1x32xf32, #tpu.memory_space<vmem>>, %arg6: memref<1x32xf32, #tpu.memory_space<vmem>>, %arg7: memref<1x1xf32, #tpu.memory_space<vmem>>, %arg8: memref<8x8xf32, #tpu.memory_space<vmem>>, %arg9: memref<8x1xf32, #tpu.memory_space<vmem>>) attributes {dimension_semantics = [#tpu.dimension_semantics<parallel>], iteration_bounds = array<i64: 2>, scalar_prefetch = 0 : i64, scratch_operands = 0 : i64, tpu.core_type = #tpu.core_type<tc>, window_params = [{transform_indices = @transform_0, window_bounds = array<i64: 8, 8, 32>}, {transform_indices = @transform_1, window_bounds = array<i64: 8, 8>}, {pipeline_mode = #tpu.pipeline_mode<synchronous>, transform_indices = @transform_2, window_bounds = array<i64: 32, 32>}, {pipeline_mode = #tpu.pipeline_mode<synchronous>, transform_indices = @transform_3, window_bounds = array<i64: 1, 32>}, {pipeline_mode = #tpu.pipeline_mode<synchronous>, transform_indices = @transform_4, window_bounds = array<i64: 1, 32>}, {pipeline_mode = #tpu.pipeline_mode<synchronous>, transform_indices = @transform_5, window_bounds = array<i64: 1, 32>}, {pipeline_mode = #tpu.pipeline_mode<synchronous>, transform_indices = @transform_6, window_bounds = array<i64: 1, 1>}, {transform_indices = @transform_7, window_bounds = array<i64: 8, 8>}, {transform_indices = @transform_8, window_bounds = array<i64: 8, 1>}]} {
    %c0 = arith.constant 0 : index
    %c0_0 = arith.constant 0 : index
    %c0_1 = arith.constant 0 : index
    %0 = vector.load %arg1[%c0, %c0_0, %c0_1] : memref<8x8x32xf32, #tpu.memory_space<vmem>>, vector<8x8x32xf32>
    %1 = arith.truncf %0 : vector<8x8x32xf32> to vector<8x8x32xbf16>
    %2 = vector.shape_cast %1 : vector<8x8x32xbf16> to vector<64x32xbf16>
    %c0_2 = arith.constant 0 : index
    %c0_3 = arith.constant 0 : index
    %3 = vector.load %arg3[%c0_2, %c0_3] : memref<32x32xbf16, #tpu.memory_space<vmem>>, vector<32x32xbf16>
    %cst = arith.constant dense<0.000000e+00> : vector<64x32xf32>
    %4 = tpu.matmul %2, %3, %cst {dimension_numbers = #tpu.dot_dimension_numbers<[1], [0], [0], [1], [0, 0, 1, 1], [], []>} : vector<64x32xbf16>, vector<32x32xbf16>, vector<64x32xf32> -> vector<64x32xf32>
    %c0_4 = arith.constant 0 : index
    %c0_5 = arith.constant 0 : index
    %5 = vector.load %arg4[%c0_4, %c0_5] : memref<1x32xf32, #tpu.memory_space<vmem>>, vector<1x32xf32>
    %6 = vector.broadcast %5 : vector<1x32xf32> to vector<64x32xf32>
    %7 = arith.addf %4, %6 : vector<64x32xf32>
    %8 = math.tanh %7 : vector<64x32xf32>
    %9 = vector.shape_cast %8 : vector<64x32xf32> to vector<8x8x32xf32>
    %c0_6 = arith.constant 0 : index
    %c0_7 = arith.constant 0 : index
    %10 = vector.load %arg5[%c0_6, %c0_7] : memref<1x32xf32, #tpu.memory_space<vmem>>, vector<1x32xf32>
    %11 = vector.shape_cast %10 : vector<1x32xf32> to vector<1x1x32xf32>
    %12 = vector.broadcast %11 : vector<1x1x32xf32> to vector<8x8x32xf32>
    %13 = arith.mulf %9, %12 : vector<8x8x32xf32>
    %cst_8 = arith.constant dense<0.000000e+00> : vector<8x8xf32>
    %14 = vector.multi_reduction <add>, %13, %cst_8 [2] : vector<8x8x32xf32> to vector<8x8xf32>
    %c0_9 = arith.constant 0 : index
    %c0_10 = arith.constant 0 : index
    %15 = vector.load %arg2[%c0_9, %c0_10] : memref<8x8xf32, #tpu.memory_space<vmem>>, vector<8x8xf32>
    %cst_11 = arith.constant 5.000000e-01 : f32
    %16 = vector.broadcast %cst_11 : f32 to vector<8x8xf32>
    %17 = arith.cmpf ogt, %15, %16 : vector<8x8xf32>
    %cst_12 = arith.constant -1.000000e+30 : f32
    %18 = vector.broadcast %cst_12 : f32 to vector<8x8xf32>
    %19 = arith.select %17, %18, %14 : vector<8x8xi1>, vector<8x8xf32>
    %cst_13 = arith.constant dense<0xFF800000> : vector<8xf32>
    %20 = vector.multi_reduction <maximumf>, %19, %cst_13 [1] : vector<8x8xf32> to vector<8xf32>
    %21 = vector.shape_cast %20 : vector<8xf32> to vector<8x1xf32>
    %22 = vector.broadcast %21 : vector<8x1xf32> to vector<8x8xf32>
    %23 = arith.subf %19, %22 : vector<8x8xf32>
    %24 = math.exp %23 : vector<8x8xf32>
    %cst_14 = arith.constant dense<0.000000e+00> : vector<8xf32>
    %25 = vector.multi_reduction <add>, %24, %cst_14 [1] : vector<8x8xf32> to vector<8xf32>
    %26 = vector.shape_cast %25 : vector<8xf32> to vector<8x1xf32>
    %27 = tpu.reciprocal %26 {approx = true} : vector<8x1xf32> -> vector<8x1xf32>
    %28 = vector.broadcast %27 : vector<8x1xf32> to vector<8x8xf32>
    %29 = arith.mulf %24, %28 : vector<8x8xf32>
    %c0_15 = arith.constant 0 : index
    %c0_16 = arith.constant 0 : index
    %30 = vector.load %arg8[%c0_15, %c0_16] : memref<8x8xf32, #tpu.memory_space<vmem>>, vector<8x8xf32>
    tpu.vector_store %arg8[%c0_15, %c0_16], %29 {strides = array<i32>} : memref<8x8xf32, #tpu.memory_space<vmem>>, vector<8x8xf32>,
    %31 = vector.shape_cast %29 : vector<8x8xf32> to vector<8x8x1xf32>
    %32 = vector.broadcast %31 : vector<8x8x1xf32> to vector<8x8x32xf32>
    %33 = arith.mulf %32, %0 : vector<8x8x32xf32>
    %cst_17 = arith.constant dense<0.000000e+00> : vector<8x32xf32>
    %34 = vector.multi_reduction <add>, %33, %cst_17 [1] : vector<8x8x32xf32> to vector<8x32xf32>
    %c0_18 = arith.constant 0 : index
    %c0_19 = arith.constant 0 : index
    %35 = vector.load %arg6[%c0_18, %c0_19] : memref<1x32xf32, #tpu.memory_space<vmem>>, vector<1x32xf32>
    %36 = vector.broadcast %35 : vector<1x32xf32> to vector<8x32xf32>
    %37 = arith.mulf %34, %36 : vector<8x32xf32>
    %cst_20 = arith.constant dense<0.000000e+00> : vector<8xf32>
    %38 = vector.multi_reduction <add>, %37, %cst_20 [1] : vector<8x32xf32> to vector<8xf32>
    %39 = vector.shape_cast %38 : vector<8xf32> to vector<8x1xf32>
    %c0_21 = arith.constant 0 : index
    %c0_22 = arith.constant 0 : index
    %40 = vector.load %arg7[%c0_21, %c0_22] : memref<1x1xf32, #tpu.memory_space<vmem>>, vector<1x1xf32>
    %41 = vector.broadcast %40 : vector<1x1xf32> to vector<8x1xf32>
    %42 = arith.addf %39, %41 : vector<8x1xf32>
    %c0_23 = arith.constant 0 : index
    %c0_24 = arith.constant 0 : index
    %43 = vector.load %arg9[%c0_23, %c0_24] : memref<8x1xf32, #tpu.memory_space<vmem>>, vector<8x1xf32>
    tpu.vector_store %arg9[%c0_23, %c0_24], %42 {strides = array<i32>} : memref<8x1xf32, #tpu.memory_space<vmem>>, vector<8x1xf32>,
    return
  }
  func.func @transform_0(%arg0: i32) -> (i32, i32, i32) {
    %c0_i32 = arith.constant 0 : i32
    %c0_i32_0 = arith.constant 0 : i32
    %c0_i32_1 = arith.constant 0 : i32
    return %arg0, %c0_i32, %c0_i32_0 : i32, i32, i32
  }
  func.func @transform_1(%arg0: i32) -> (i32, i32) {
    %c0_i32 = arith.constant 0 : i32
    %c0_i32_0 = arith.constant 0 : i32
    return %arg0, %c0_i32 : i32, i32
  }
  func.func @transform_2(%arg0: i32) -> (i32, i32) {
    %c0_i32 = arith.constant 0 : i32
    %c0_i32_0 = arith.constant 0 : i32
    %c0_i32_1 = arith.constant 0 : i32
    return %c0_i32, %c0_i32_0 : i32, i32
  }
  func.func @transform_3(%arg0: i32) -> (i32, i32) {
    %c0_i32 = arith.constant 0 : i32
    %c0_i32_0 = arith.constant 0 : i32
    %c0_i32_1 = arith.constant 0 : i32
    return %c0_i32, %c0_i32_0 : i32, i32
  }
  func.func @transform_4(%arg0: i32) -> (i32, i32) {
    %c0_i32 = arith.constant 0 : i32
    %c0_i32_0 = arith.constant 0 : i32
    %c0_i32_1 = arith.constant 0 : i32
    return %c0_i32, %c0_i32_0 : i32, i32
  }
  func.func @transform_5(%arg0: i32) -> (i32, i32) {
    %c0_i32 = arith.constant 0 : i32
    %c0_i32_0 = arith.constant 0 : i32
    %c0_i32_1 = arith.constant 0 : i32
    return %c0_i32, %c0_i32_0 : i32, i32
  }
  func.func @transform_6(%arg0: i32) -> (i32, i32) {
    %c0_i32 = arith.constant 0 : i32
    %c0_i32_0 = arith.constant 0 : i32
    %c0_i32_1 = arith.constant 0 : i32
    return %c0_i32, %c0_i32_0 : i32, i32
  }
  func.func @transform_7(%arg0: i32) -> (i32, i32) {
    %c0_i32 = arith.constant 0 : i32
    %c0_i32_0 = arith.constant 0 : i32
    return %arg0, %c0_i32 : i32, i32
  }
  func.func @transform_8(%arg0: i32) -> (i32, i32) {
    %c0_i32 = arith.constant 0 : i32
    %c0_i32_0 = arith.constant 0 : i32
    return %arg0, %c0_i32 : i32, i32
  }
}

</mosaic_0001>

<llo_original>
// kernel: tpu_custom_call.1
$region0: #{tpu_custom_call.1}
  #allocation0 [shape = 'u32[]', space=smem, size = 0x4, offset = 0x4, fixed_abs, tag = 'smem constant byte address 0x4 - core index']
  #allocation1 [shape = 'u32[144,128]{1,0:T(1,128)}', space=vmem, size = 0x12000, scoped, tag = 'internal scratch']
  #allocation2 [shape = 'f32[1,1]{1,0:T(1,128)S(1)}', space=vmem, size = 0x200, scoped, tag = 'scoped memory for tpu_custom_call.1']
  %s0 = inlined_call_operand.hbm [shape: f32[16,8,32], index: 0, kind: input, shape index: {}]
  %s1 = inlined_call_operand.vmem [shape: f32[16,8], index: 1, kind: input, shape index: {}]
  %s2 = inlined_call_operand.vmem [shape: bf16[32,32], index: 2, kind: input, shape index: {}]
  %s3 = inlined_call_operand.vmem [shape: f32[1,32], index: 3, kind: input, shape index: {}]
  %s4 = inlined_call_operand.vmem [shape: f32[1,32], index: 4, kind: input, shape index: {}]
  %s5 = inlined_call_operand.vmem [shape: f32[1,32], index: 5, kind: input, shape index: {}]
  %s6 = inlined_call_operand.<no memory space> [shape: f32[1,1], index: 6, kind: input, shape index: {}]
  %s7 = inlined_call_operand.vmem [shape: f32[16,8], index: 7, kind: output, shape index: {0}]
  %s8 = inlined_call_operand.vmem [shape: f32[16,1], index: 8, kind: output, shape index: {1}]
  %9 = xla_tuple %s7, %s8
  %s10 = sld [smem:[#allocation0]]
  $region73: #{tpu_custom_call.1} parent=0
    _
  %s12 = ssub.s32 1, %s10
  %s13 = scalar_select 0, %s12, %s10
  %v14 = vstv %s6
  %15 = vst [vmem:[#allocation2] sm:$0x1] %v14
  $region1: #{tpu_custom_call.1} parent=0
    #allocation3 [shape = 'u8[65536]{0}', space=vmem, size = 0x10000, scoped, tag = 'input window, operand 0']
    #allocation4 [shape = 's32[2]{0}', space=sflag, size = 0x8, scoped, tag = 'scoped memory for tpu_custom_call.1']
    %16 = vsyncpa [#allocation4], 0
    %s17 = scalar_lea.sflag [#allocation4], 1
    %18 = vsyncpa %s17, 0
    loop: start=0, step=1, limit=4
    $region2: #{tpu_custom_call.1} parent=1 // loop_pre_header
      _
    $region3: #{tpu_custom_call.1} parent=1 // loop_header
      %s20 = sphi 0, %s24
      %p21 = scmp.ge.s32.totalorder %s20, 4
      %s30 = sphi 0, %s32
      %s33 = sphi 0, %s30
      %s34 = sphi 0, %s33
      %s50 = sphi 0, %s34
      %s56 = sphi 0, %s58
      %s59 = sphi 0, %s56
      %s60 = sphi 0, %s59
      %s76 = sphi 0, %s60
      %s80 = sphi 0, %s80
      %s82 = sphi 0, %s80
      %s83 = sphi 0, %s82
      %s97 = sphi 0, %s83
      %s101 = sphi 0, %s101
      %s103 = sphi 0, %s101
      %s104 = sphi 0, %s103
      %s118 = sphi 0, %s104
      %s122 = sphi 0, %s122
      %s124 = sphi 0, %s122
      %s125 = sphi 0, %s124
      %s139 = sphi 0, %s125
      %s143 = sphi 0, %s143
      %s145 = sphi 0, %s143
      %s146 = sphi 0, %s145
      %s160 = sphi 0, %s146
      %s164 = sphi 0, %s164
      %s166 = sphi 0, %s164
      %s167 = sphi 0, %s166
      %s181 = sphi 0, %s167
      %s187 = sphi 0, %s189
      %s190 = sphi 0, %s187
      %s191 = sphi 0, %s190
      %s207 = sphi 0, %s191
      %s213 = sphi 0, %s215
      %s216 = sphi 0, %s213
      %s217 = sphi 0, %s216
      %s233 = sphi 0, %s217
    $region4: #{tpu_custom_call.1} parent=1 // loop_header_branch
      %23 = sbr.rel (%p21) target = $region8
    $region5: #{tpu_custom_call.1} parent=1 // loop_body
      %s25 = ssub.s32 %s20, 1
      %s26 = ssub.s32 %s20, 2
      %s27 = sadd.s32 %s20, 1
      %s28 = ssub.s32 %s20, %s27
      %p29 = scmp.eq.s32.totalorder %s28, 0
      %s31 = sadd.s32 %s30, 1
      %s32 = scalar_select %p29, %s30, %s31
      %p35 = pneg %p29
      %p36 = scmp.eq.s32.totalorder %s20, 1
      %p37 = por %p35, %p36
      %p38 = scmp.ne.s32.totalorder %s30, %s33
      %p39 = scmp.eq.s32.totalorder %s20, 0
      %p40 = por %p38, %p39
      %p41 = scmp.ne.s32.totalorder %s30, %s33
      %p42 = scmp.eq.s32.totalorder %s25, 1
      %p43 = por %p41, %p42
      %p44 = scmp.ne.s32.totalorder %s33, %s34
      %p45 = scmp.eq.s32.totalorder %s25, 0
      %p46 = por %p44, %p45
      %p47 = scmp.ne.s32.totalorder %s33, %s34
      %p48 = scmp.eq.s32.totalorder %s26, 1
      %p49 = por %p47, %p48
      %p51 = scmp.ne.s32.totalorder %s34, %s50
      %p52 = scmp.eq.s32.totalorder %s26, 0
      %p53 = por %p51, %p52
      %s54 = ssub.s32 %s20, %s27
      %p55 = scmp.eq.s32.totalorder %s54, 0
      %s57 = sadd.s32 %s56, 1
      %s58 = scalar_select %p55, %s56, %s57
      %p61 = pneg %p55
      %p62 = scmp.eq.s32.totalorder %s20, 1
      %p63 = por %p61, %p62
      %p64 = scmp.ne.s32.totalorder %s56, %s59
      %p65 = scmp.eq.s32.totalorder %s20, 0
      %p66 = por %p64, %p65
      %p67 = scmp.ne.s32.totalorder %s56, %s59
      %p68 = scmp.eq.s32.totalorder %s25, 1
      %p69 = por %p67, %p68
      %p70 = scmp.ne.s32.totalorder %s59, %s60
      %p71 = scmp.eq.s32.totalorder %s25, 0
      %p72 = por %p70, %p71
      %p73 = scmp.ne.s32.totalorder %s59, %s60
      %p74 = scmp.eq.s32.totalorder %s26, 1
      %p75 = por %p73, %p74
      %p77 = scmp.ne.s32.totalorder %s60, %s76
      %p78 = scmp.eq.s32.totalorder %s26, 0
      %p79 = por %p77, %p78
      %s81 = sadd.s32 %s80, 1
      %p84 = scmp.eq.s32.totalorder %s20, 1
      %p85 = scmp.ne.s32.totalorder %s80, %s82
      %p86 = scmp.eq.s32.totalorder %s20, 0
      %p87 = por %p85, %p86
      %p88 = scmp.ne.s32.totalorder %s80, %s82
      %p89 = scmp.eq.s32.totalorder %s25, 1
      %p90 = por %p88, %p89
      %p91 = scmp.ne.s32.totalorder %s82, %s83
      %p92 = scmp.eq.s32.totalorder %s25, 0
      %p93 = por %p91, %p92
      %p94 = scmp.ne.s32.totalorder %s82, %s83
      %p95 = scmp.eq.s32.totalorder %s26, 1
      %p96 = por %p94, %p95
      %p98 = scmp.ne.s32.totalorder %s83, %s97
      %p99 = scmp.eq.s32.totalorder %s26, 0
      %p100 = por %p98, %p99
      %s102 = sadd.s32 %s101, 1
      %p105 = scmp.eq.s32.totalorder %s20, 1
      %p106 = scmp.ne.s32.totalorder %s101, %s103
      %p107 = scmp.eq.s32.totalorder %s20, 0
      %p108 = por %p106, %p107
      %p109 = scmp.ne.s32.totalorder %s101, %s103
      %p110 = scmp.eq.s32.totalorder %s25, 1
      %p111 = por %p109, %p110
      %p112 = scmp.ne.s32.totalorder %s103, %s104
      %p113 = scmp.eq.s32.totalorder %s25, 0
      %p114 = por %p112, %p113
      %p115 = scmp.ne.s32.totalorder %s103, %s104
      %p116 = scmp.eq.s32.totalorder %s26, 1
      %p117 = por %p115, %p116
      %p119 = scmp.ne.s32.totalorder %s104, %s118
      %p120 = scmp.eq.s32.totalorder %s26, 0
      %p121 = por %p119, %p120
      %s123 = sadd.s32 %s122, 1
      %p126 = scmp.eq.s32.totalorder %s20, 1
      %p127 = scmp.ne.s32.totalorder %s122, %s124
      %p128 = scmp.eq.s32.totalorder %s20, 0
      %p129 = por %p127, %p128
      %p130 = scmp.ne.s32.totalorder %s122, %s124
      %p131 = scmp.eq.s32.totalorder %s25, 1
      %p132 = por %p130, %p131
      %p133 = scmp.ne.s32.totalorder %s124, %s125
      %p134 = scmp.eq.s32.totalorder %s25, 0
      %p135 = por %p133, %p134
      %p136 = scmp.ne.s32.totalorder %s124, %s125
      %p137 = scmp.eq.s32.totalorder %s26, 1
      %p138 = por %p136, %p137
      %p140 = scmp.ne.s32.totalorder %s125, %s139
      %p141 = scmp.eq.s32.totalorder %s26, 0
      %p142 = por %p140, %p141
      %s144 = sadd.s32 %s143, 1
      %p147 = scmp.eq.s32.totalorder %s20, 1
      %p148 = scmp.ne.s32.totalorder %s143, %s145
      %p149 = scmp.eq.s32.totalorder %s20, 0
      %p150 = por %p148, %p149
      %p151 = scmp.ne.s32.totalorder %s143, %s145
      %p152 = scmp.eq.s32.totalorder %s25, 1
      %p153 = por %p151, %p152
      %p154 = scmp.ne.s32.totalorder %s145, %s146
      %p155 = scmp.eq.s32.totalorder %s25, 0
      %p156 = por %p154, %p155
      %p157 = scmp.ne.s32.totalorder %s145, %s146
      %p158 = scmp.eq.s32.totalorder %s26, 1
      %p159 = por %p157, %p158
      %p161 = scmp.ne.s32.totalorder %s146, %s160
      %p162 = scmp.eq.s32.totalorder %s26, 0
      %p163 = por %p161, %p162
      %s165 = sadd.s32 %s164, 1
      %p168 = scmp.eq.s32.totalorder %s20, 1
      %p169 = scmp.ne.s32.totalorder %s164, %s166
      %p170 = scmp.eq.s32.totalorder %s20, 0
      %p171 = por %p169, %p170
      %p172 = scmp.ne.s32.totalorder %s164, %s166
      %p173 = scmp.eq.s32.totalorder %s25, 1
      %p174 = por %p172, %p173
      %p175 = scmp.ne.s32.totalorder %s166, %s167
      %p176 = scmp.eq.s32.totalorder %s25, 0
      %p177 = por %p175, %p176
      %p178 = scmp.ne.s32.totalorder %s166, %s167
      %p179 = scmp.eq.s32.totalorder %s26, 1
      %p180 = por %p178, %p179
      %p182 = scmp.ne.s32.totalorder %s167, %s181
      %p183 = scmp.eq.s32.totalorder %s26, 0
      %p184 = por %p182, %p183
      %s185 = ssub.s32 %s20, %s27
      %p186 = scmp.eq.s32.totalorder %s185, 0
      %s188 = sadd.s32 %s187, 1
      %s189 = scalar_select %p186, %s187, %s188
      %p192 = pneg %p186
      %p193 = scmp.eq.s32.totalorder %s20, 1
      %p194 = por %p192, %p193
      %p195 = scmp.ne.s32.totalorder %s187, %s190
      %p196 = scmp.eq.s32.totalorder %s20, 0
      %p197 = por %p195, %p196
      %p198 = scmp.ne.s32.totalorder %s187, %s190
      %p199 = scmp.eq.s32.totalorder %s25, 1
      %p200 = por %p198, %p199
      %p201 = scmp.ne.s32.totalorder %s190, %s191
      %p202 = scmp.eq.s32.totalorder %s25, 0
      %p203 = por %p201, %p202
      %p204 = scmp.ne.s32.totalorder %s190, %s191
      %p205 = scmp.eq.s32.totalorder %s26, 1
      %p206 = por %p204, %p205
      %p208 = scmp.ne.s32.totalorder %s191, %s207
      %p209 = scmp.eq.s32.totalorder %s26, 0
      %p210 = por %p208, %p209
      %s211 = ssub.s32 %s20, %s27
      %p212 = scmp.eq.s32.totalorder %s211, 0
      %s214 = sadd.s32 %s213, 1
      %s215 = scalar_select %p212, %s213, %s214
      %p218 = pneg %p212
      %p219 = scmp.eq.s32.totalorder %s20, 1
      %p220 = por %p218, %p219
      %p221 = scmp.ne.s32.totalorder %s213, %s216
      %p222 = scmp.eq.s32.totalorder %s20, 0
      %p223 = por %p221, %p222
      %p224 = scmp.ne.s32.totalorder %s213, %s216
      %p225 = scmp.eq.s32.totalorder %s25, 1
      %p226 = por %p224, %p225
      %p227 = scmp.ne.s32.totalorder %s216, %s217
      %p228 = scmp.eq.s32.totalorder %s25, 0
      %p229 = por %p227, %p228
      %p230 = scmp.ne.s32.totalorder %s216, %s217
      %p231 = scmp.eq.s32.totalorder %s26, 1
      %p232 = por %p230, %p231
      %p234 = scmp.ne.s32.totalorder %s217, %s233
      %p235 = scmp.eq.s32.totalorder %s26, 0
      %p236 = por %p234, %p235
      %p237 = scmp.le.s32.totalorder 1, %s20
      %p238 = scmp.lt.s32.totalorder %s20, 3
      %p239 = pnand %p237, %p238
      %p240 = pneg %p239
      // Predicated region
      $region9: #{tpu_custom_call.1} parent=5 // pred_check
        _
      $region10: #{tpu_custom_call.1} parent=5 // pred_check_branch
        %242 = sbr.rel (%p239) target = $region12
      $region11: #{tpu_custom_call.1} parent=5 // pred_region
        %s243 = ssub.s32 %s20, 1
        // Predicated region
        $region13: #{tpu_custom_call.1} parent=11 // pred_check
          %p244 = pneg %p93
        $region14: #{tpu_custom_call.1} parent=11 // pred_check_branch
          %246 = sbr.rel (%p244) target = $region16
        $region15: #{tpu_custom_call.1} parent=11 // pred_region
          _
        $region16: #{tpu_custom_call.1} parent=11 // pred_fallthru
          _
        // Predicated region
        $region17: #{tpu_custom_call.1} parent=11 // pred_check
          %p247 = pneg %p114
        $region18: #{tpu_custom_call.1} parent=11 // pred_check_branch
          %249 = sbr.rel (%p247) target = $region20
        $region19: #{tpu_custom_call.1} parent=11 // pred_region
          _
        $region20: #{tpu_custom_call.1} parent=11 // pred_fallthru
          _
        // Predicated region
        $region21: #{tpu_custom_call.1} parent=11 // pred_check
          %p250 = pneg %p135
        $region22: #{tpu_custom_call.1} parent=11 // pred_check_branch
          %252 = sbr.rel (%p250) target = $region24
        $region23: #{tpu_custom_call.1} parent=11 // pred_region
          _
        $region24: #{tpu_custom_call.1} parent=11 // pred_fallthru
          _
        // Predicated region
        $region25: #{tpu_custom_call.1} parent=11 // pred_check
          %p253 = pneg %p156
        $region26: #{tpu_custom_call.1} parent=11 // pred_check_branch
          %255 = sbr.rel (%p253) target = $region28
        $region27: #{tpu_custom_call.1} parent=11 // pred_region
          _
        $region28: #{tpu_custom_call.1} parent=11 // pred_fallthru
          _
        // Predicated region
        $region29: #{tpu_custom_call.1} parent=11 // pred_check
          %p256 = pneg %p177
        $region30: #{tpu_custom_call.1} parent=11 // pred_check_branch
          %258 = sbr.rel (%p256) target = $region32
        $region31: #{tpu_custom_call.1} parent=11 // pred_region
          _
        $region32: #{tpu_custom_call.1} parent=11 // pred_fallthru
          _
      $region12: #{tpu_custom_call.1} parent=5 // pred_fallthru
        _
      %p259 = scmp.lt.s32.totalorder %s20, 2
      // Predicated region
      $region33: #{tpu_custom_call.1} parent=5 // pred_check
        %p260 = pneg %p259
      $region34: #{tpu_custom_call.1} parent=5 // pred_check_branch
        %262 = sbr.rel (%p260) target = $region36
      $region35: #{tpu_custom_call.1} parent=5 // pred_region
        // Predicated region
        $region37: #{tpu_custom_call.1} parent=35 // pred_check
          %p263 = pneg %p40
        $region38: #{tpu_custom_call.1} parent=35 // pred_check_branch
          %265 = sbr.rel (%p263) target = $region40
        $region39: #{tpu_custom_call.1} parent=35 // pred_region
          %s266 = sand.u32 %s30, 1
          %s267 = scalar_lea.sflag [#allocation4], %s266
          %s268 = sand.u32 %s30, 1
          %s269 = smul.addr %s268, 64
          %s270 = scalar_lea.vmem [#allocation3], %s269
          %s271 = smul.u32 8, %s20
          %s273 = ssub.s32 1024, 1024
          %274 = vsyncadd %s267, %s273
          %s275 = smul.addr %s271, 128
          %s276 = scalar_lea.hbm %s0, %s275
          %s277 = sshll.u32 %s270, 4
          %s278 = int_to_ptr.vmem [resolvable:$true] %s277
          %283 = dma.hbm_to_vmem [thread:$0]  %s276, 1024, %s278, %s267, 128, 128, 8
        $region40: #{tpu_custom_call.1} parent=35 // pred_fallthru
          _
        // Predicated region
        $region41: #{tpu_custom_call.1} parent=35 // pred_check
          %p284 = pneg %p66
        $region42: #{tpu_custom_call.1} parent=35 // pred_check_branch
          %286 = sbr.rel (%p284) target = $region44
        $region43: #{tpu_custom_call.1} parent=35 // pred_region
          %p287 = scmp.lt.s32.totalorder %s20, 1
          %s288 = scalar_select %p287, %s20, 1
          %s289 = smul.addr %s288, 8
          %s290 = scalar_lea.vmem %s1, %s289
        $region44: #{tpu_custom_call.1} parent=35 // pred_fallthru
          _
      $region36: #{tpu_custom_call.1} parent=5 // pred_fallthru
        _
      %p291 = scmp.le.s32.totalorder 1, %s20
      %p292 = scmp.lt.s32.totalorder %s20, 3
      %p293 = pnand %p291, %p292
      %p294 = pneg %p293
      // Predicated region
      $region45: #{tpu_custom_call.1} parent=5 // pred_check
        _
      $region46: #{tpu_custom_call.1} parent=5 // pred_check_branch
        %296 = sbr.rel (%p293) target = $region48
      $region47: #{tpu_custom_call.1} parent=5 // pred_region
        %s297 = ssub.s32 %s20, 1
        %s298 = sand.u32 %s33, 1
        %s299 = scalar_lea.sflag [#allocation4], %s298
        %s300 = sand.u32 %s33, 1
        %s301 = smul.addr %s300, 64
        %s302 = scalar_lea.vmem [#allocation3], %s301
        // Predicated region
        $region49: #{tpu_custom_call.1} parent=47 // pred_check
          %p303 = pneg %p46
        $region50: #{tpu_custom_call.1} parent=47 // pred_check_branch
          %305 = sbr.rel (%p303) target = $region52
        $region51: #{tpu_custom_call.1} parent=47 // pred_region
          %306 = dma.done %s299, 1024
        $region52: #{tpu_custom_call.1} parent=47 // pred_fallthru
          _
        %s307 = sand.u32 %s33, 1
        %s308 = scalar_lea.sflag [#allocation4], %s307
        %s309 = sand.u32 %s33, 1
        %s310 = smul.addr %s309, 64
        %s311 = scalar_lea.vmem [#allocation3], %s310
        %p312 = pneg %p46
        %p313 = pneg %p43
        %p314 = scmp.lt.s32.totalorder %s25, 1
        %s315 = scalar_select %p314, %s25, 1
        %s316 = smul.addr %s315, 8
        %s317 = scalar_lea.vmem %s1, %s316
        %p318 = pneg %p72
        %p319 = pneg %p69
        %p320 = pneg %p93
        %p321 = pneg %p90
        %p322 = pneg %p114
        %p323 = pneg %p111
        %p324 = pneg %p135
        %p325 = pneg %p132
        %p326 = pneg %p156
        %p327 = pneg %p153
        %p328 = pneg %p177
        %p329 = pneg %p174
        %p330 = pneg %p203
        %p331 = pneg %p200
        %p332 = scmp.lt.s32.totalorder %s25, 1
        %s333 = scalar_select %p332, %s25, 1
        %s334 = smul.addr %s333, 8
        %s335 = scalar_lea.vmem %s7, %s334
        %p336 = pneg %p229
        %p337 = pneg %p226
        %p338 = scmp.lt.s32.totalorder %s25, 1
        %s339 = scalar_select %p338, %s25, 1
        %s340 = smul.addr %s339, 8
        %s341 = scalar_lea.vmem %s8, %s340
        %s342 = smul.u32 8, %s25
        %p343 = scmp.lt.s32.totalorder %s25, 1
        %s344 = scalar_select %p343, %s25, 1
        %s345 = smul.addr %s344, 8
        %s346 = scalar_lea.vmem %s1, %s345
        %p347 = scmp.lt.s32.totalorder %s25, 1
        %s348 = scalar_select %p347, %s25, 1
        %s349 = smul.addr %s348, 8
        %s350 = scalar_lea.vmem %s7, %s349
        %p351 = scmp.lt.s32.totalorder %s25, 1
        %s352 = scalar_select %p351, %s25, 1
        %s353 = smul.addr %s352, 8
        %s354 = scalar_lea.vmem %s8, %s353
        %v356 = vld [vmem:[%s302] sm:$0xff]
        %v357 = vld [vmem:[%s302 + $0x8] sm:$0xff]
        %v358 = vld [vmem:[%s302 + $0x10] sm:$0xff]
        %v359 = vld [vmem:[%s302 + $0x18] sm:$0xff]
        %v360 = vld [vmem:[%s302 + $0x20] sm:$0xff]
        %v361 = vld [vmem:[%s302 + $0x28] sm:$0xff]
        %v362 = vld [vmem:[%s302 + $0x30] sm:$0xff]
        %v363 = vld [vmem:[%s302 + $0x38] sm:$0xff]
        %v364 = vpack.c.bf16 %v356, %v356
        %v365 = vpack.c.bf16 %v357, %v357
        %v366 = vpack.c.bf16 %v358, %v358
        %v367 = vpack.c.bf16 %v359, %v359
        %v368 = vpack.c.bf16 %v360, %v360
        %v369 = vpack.c.bf16 %v361, %v361
        %v370 = vpack.c.bf16 %v362, %v362
        %v371 = vpack.c.bf16 %v363, %v363
        %v372 = vld [vmem:[%s2] sm:$0xf]
        %v373 = vld [vmem:[%s2 + $0x4] sm:$0xf]
        %v374 = vld [vmem:[%s2 + $0x8] sm:$0xf]
        %v375 = vld [vmem:[%s2 + $0xc] sm:$0xf]
        %v376 = vld [vmem:[%s3] sm:$0x1]
        %v378 = vlaneseq
        %v379 = vshrl.u32 %v378, 7
        %v380 = vsub.s32 0, %v379
        %v381 = vrot.slane %v376, %v380
        %v391 = vunpack.c.l.b16 %v364
        %v392 = vunpack.c.l.b16 %v365
        %v393 = vunpack.c.l.b16 %v366
        %v394 = vunpack.c.l.b16 %v367
        %v395 = vunpack.c.l.b16 %v368
        %v396 = vunpack.c.l.b16 %v369
        %v397 = vunpack.c.l.b16 %v370
        %v398 = vunpack.c.l.b16 %v371
        %v399 = vpack.c.b16 %v392, %v391
        %v400 = vpack.c.b16 %v394, %v393
        %v401 = vpack.c.b16 %v396, %v395
        %v402 = vpack.c.b16 %v398, %v397
        %v407 = vunpack.c.l.b16 %v372
        %v408 = vunpack.c.l.b16 %v373
        %v409 = vunpack.c.l.b16 %v374
        %v410 = vunpack.c.l.b16 %v375
        %v411 = vpack.c.b16 %v408, %v407
        %v412 = vpack.c.b16 %v410, %v409
        %vm415 = vcmask 261120
        %v417 = vsel %vm415, %v399, 0
        %v420 = vsel %vm415, %v400, 0
        %v423 = vsel %vm415, %v401, 0
        %v426 = vsel %vm415, %v402, 0
        %428 = vmatprep.subr.bf16.mxu0 0
        %429 = vmatpush1.bf16.msra.mxu0 %v411
        %430 = vmatprep.subr.bf16.mxu0 0
        %431 = vmatpush1.bf16.msra.mxu0 %v412
        %432 = vmatprep.subr.bf16.mxu0 0
        %433 = vmatpush1.bf16.msra.mxu0 0
        %434 = vmatprep.subr.bf16.mxu0 0
        %435 = vmatpush1.bf16.msra.mxu0 0
        %436 = vmatprep.subr.bf16.mxu0 0
        %437 = vmatpush1.bf16.msra.mxu0 0
        %438 = vmatprep.subr.bf16.mxu0 0
        %439 = vmatpush1.bf16.msra.mxu0 0
        %440 = vmatprep.subr.bf16.mxu0 0
        %441 = vmatpush1.bf16.msra.mxu0 0
        %442 = vmatprep.subr.bf16.mxu0 0
        %443 = vmatpush1.bf16.msra.mxu0 0
        %444 = vmatprep.subr.bf16.mxu0 0
        %445 = vmatpush1.bf16.msra.mxu0 0
        %446 = vmatprep.subr.bf16.mxu0 0
        %447 = vmatpush1.bf16.msra.mxu0 0
        %448 = vmatprep.subr.bf16.mxu0 0
        %449 = vmatpush1.bf16.msra.mxu0 0
        %450 = vmatprep.subr.bf16.mxu0 0
        %451 = vmatpush1.bf16.msra.mxu0 0
        %452 = vmatprep.subr.bf16.mxu0 0
        %453 = vmatpush1.bf16.msra.mxu0 0
        %454 = vmatprep.subr.bf16.mxu0 0
        %455 = vmatpush1.bf16.msra.mxu0 0
        %456 = vmatprep.subr.bf16.mxu0 0
        %457 = vmatpush1.bf16.msra.mxu0 0
        %458 = vmatprep.subr.bf16.mxu0 0
        %459 = vmatpush1.bf16.msra.mxu0 0
        %460 = vmatprep.mubr.bf16.mxu0 0
        %461 = vmatmul.mubr.bf16.gmra.mrb[0].mxu0 %v417
        %v462 = vpop.f32.mrb[0].mxu0
        %v463 = vadd.f32 %v381, %v462
        %v464 = vpop.f32.mrb[0].mxu0
        %v465 = vpop.f32.mrb[0].mxu0
        %v466 = vadd.f32 %v381, %v465
        %v467 = vpop.f32.mrb[0].mxu0
        %468 = vmatprep.mubr.bf16.mxu0 0
        %469 = vmatmul.mubr.bf16.gmra.mrb[0].mxu0 %v420
        %v470 = vpop.f32.mrb[0].mxu0
        %v471 = vadd.f32 %v381, %v470
        %v472 = vpop.f32.mrb[0].mxu0
        %v473 = vpop.f32.mrb[0].mxu0
        %v474 = vadd.f32 %v381, %v473
        %v475 = vpop.f32.mrb[0].mxu0
        %476 = vmatprep.mubr.bf16.mxu0 0
        %477 = vmatmul.mubr.bf16.gmra.mrb[0].mxu0 %v423
        %v478 = vpop.f32.mrb[0].mxu0
        %v479 = vadd.f32 %v381, %v478
        %v480 = vpop.f32.mrb[0].mxu0
        %v481 = vpop.f32.mrb[0].mxu0
        %v482 = vadd.f32 %v381, %v481
        %v483 = vpop.f32.mrb[0].mxu0
        %484 = vmatprep.mubr.bf16.mxu0 0
        %485 = vmatmul.mubr.bf16.gmra.mrb[0].mxu0 %v426
        %v486 = vpop.f32.mrb[0].mxu0
        %v487 = vadd.f32 %v381, %v486
        %v488 = vpop.f32.mrb[0].mxu0
        %v489 = vpop.f32.mrb[0].mxu0
        %v490 = vadd.f32 %v381, %v489
        %v491 = vpop.f32.mrb[0].mxu0
        %492 = vdwg.mxu0
        %v493 = vtanh.pop %v463
        %v494 = vtanh.pop %v466
        %v495 = vtanh.pop %v471
        %v496 = vtanh.pop %v474
        %v497 = vtanh.pop %v479
        %v498 = vtanh.pop %v482
        %v499 = vtanh.pop %v487
        %v500 = vtanh.pop %v490
        %v501 = vld [vmem:[%s4] sm:$0x1]
        %v503 = vlaneseq
        %v504 = vshrl.u32 %v503, 7
        %v505 = vsub.s32 0, %v504
        %v506 = vrot.slane %v501, %v505
        %v508 = vmul.f32 %v493, %v506
        %v509 = vmul.f32 %v494, %v506
        %v510 = vmul.f32 %v495, %v506
        %v511 = vmul.f32 %v496, %v506
        %v512 = vmul.f32 %v497, %v506
        %v513 = vmul.f32 %v498, %v506
        %v514 = vmul.f32 %v499, %v506
        %v515 = vmul.f32 %v500, %v506
        %v516 = vsel %vm415, %v508, 0.0
        %517 = vadd.xlane.f32.xlu0 %v516
        %v518 = vpop.xlane.xlu0 %517
        %v519 = vsel %vm415, %v509, 0.0
        %520 = vadd.xlane.f32.xlu0 %v519
        %v521 = vpop.xlane.xlu0 %520
        %v522 = vsel %vm415, %v510, 0.0
        %523 = vadd.xlane.f32.xlu0 %v522
        %v524 = vpop.xlane.xlu0 %523
        %v525 = vsel %vm415, %v511, 0.0
        %526 = vadd.xlane.f32.xlu0 %v525
        %v527 = vpop.xlane.xlu0 %526
        %v528 = vsel %vm415, %v512, 0.0
        %529 = vadd.xlane.f32.xlu0 %v528
        %v530 = vpop.xlane.xlu0 %529
        %v531 = vsel %vm415, %v513, 0.0
        %532 = vadd.xlane.f32.xlu0 %v531
        %v533 = vpop.xlane.xlu0 %532
        %v534 = vsel %vm415, %v514, 0.0
        %535 = vadd.xlane.f32.xlu0 %v534
        %v536 = vpop.xlane.xlu0 %535
        %v537 = vsel %vm415, %v515, 0.0
        %538 = vadd.xlane.f32.xlu0 %v537
        %v539 = vpop.xlane.xlu0 %538
        %v540 = vld [vmem:[%s346] sm:$0xff]
        %vm541 = vcmp.gt.f32.partialorder %v540, 0.5
        %v550 = vlaneseq
        %v551 = vand.u32 %v550, 127
        %v552 = vlaneseq
        %v553 = vshrl.u32 %v552, 7
        %v554 = vsub.s32 %v551, %v553
        %v555 = vrot.slane %v518, %v554
        %v556 = vlaneseq
        %v557 = vshrl.u32 %v556, 7
        %v558 = vsub.s32 %v551, %v557
        %v559 = vrot.slane %v521, %v558
        %v560 = vlaneseq
        %v561 = vshrl.u32 %v560, 7
        %v562 = vsub.s32 %v551, %v561
        %v563 = vrot.slane %v524, %v562
        %v564 = vlaneseq
        %v565 = vshrl.u32 %v564, 7
        %v566 = vsub.s32 %v551, %v565
        %v567 = vrot.slane %v527, %v566
        %v568 = vlaneseq
        %v569 = vshrl.u32 %v568, 7
        %v570 = vsub.s32 %v551, %v569
        %v571 = vrot.slane %v530, %v570
        %v572 = vlaneseq
        %v573 = vshrl.u32 %v572, 7
        %v574 = vsub.s32 %v551, %v573
        %v575 = vrot.slane %v533, %v574
        %v576 = vlaneseq
        %v577 = vshrl.u32 %v576, 7
        %v578 = vsub.s32 %v551, %v577
        %v579 = vrot.slane %v536, %v578
        %v580 = vlaneseq
        %v581 = vshrl.u32 %v580, 7
        %v582 = vsub.s32 %v551, %v581
        %v583 = vrot.slane %v539, %v582
        %vm584 = vcmask 1041409
        %v585 = vsel %vm584, %v559, %v555
        %vm586 = vcmask 1042434
        %v587 = vsel %vm586, %v563, %v585
        %vm588 = vcmask 1043459
        %v589 = vsel %vm588, %v567, %v587
        %vm590 = vcmask 1044484
        %v591 = vsel %vm590, %v571, %v589
        %vm592 = vcmask 1045509
        %v593 = vsel %vm592, %v575, %v591
        %vm594 = vcmask 1046534
        %v595 = vsel %vm594, %v579, %v593
        %vm596 = vcmask 1047559
        %v597 = vsel %vm596, %v583, %v595
        %v599 = vsel %vm541, -1e+30, %v597
        %vm600 = vcmask 64512
        %v601 = vsel %vm600, %v599, -inf
        %602 = vmax.xlane.f32.xlu0 %v601
        %v603 = vpop.xlane.xlu0 %602
        %v604 = vsub.f32 %v599, %v603
        %v605 = vmul.f32 %v604, 1.442695
        %v606 = vpow.pop %v605
        %v607 = vsel %vm600, %v606, 0.0
        %608 = vadd.xlane.f32.xlu0 %v607
        %v609 = vpop.xlane.xlu0 %608
        %v610 = vrcp.pop %v609
        %v611 = vmul.f32 %v606, %v610
        %612 = vst.msk [vmem:[%s350] sm:$0xff] %vm600, %v611
        %v613 = vlaneseq
        %v614 = vshrl.u32 %v613, 7
        %v615 = vsub.s32 0, %v614
        %v616 = vrot.slane %v611, %v615
        %618 = vbcast.lane.b32.xlu0 %v616, 256
        %v619 = vpop.permute.xlu0 %618
        %v620 = vlaneseq
        %v621 = vshrl.u32 %v620, 7
        %v622 = vsub.s32 1, %v621
        %v623 = vrot.slane %v611, %v622
        %625 = vbcast.lane.b32.xlu0 %v623, 256
        %v626 = vpop.permute.xlu0 %625
        %v627 = vlaneseq
        %v628 = vshrl.u32 %v627, 7
        %v629 = vsub.s32 2, %v628
        %v630 = vrot.slane %v611, %v629
        %632 = vbcast.lane.b32.xlu0 %v630, 256
        %v633 = vpop.permute.xlu0 %632
        %v634 = vlaneseq
        %v635 = vshrl.u32 %v634, 7
        %v636 = vsub.s32 3, %v635
        %v637 = vrot.slane %v611, %v636
        %639 = vbcast.lane.b32.xlu0 %v637, 256
        %v640 = vpop.permute.xlu0 %639
        %v641 = vlaneseq
        %v642 = vshrl.u32 %v641, 7
        %v643 = vsub.s32 4, %v642
        %v644 = vrot.slane %v611, %v643
        %646 = vbcast.lane.b32.xlu0 %v644, 256
        %v647 = vpop.permute.xlu0 %646
        %v648 = vlaneseq
        %v649 = vshrl.u32 %v648, 7
        %v650 = vsub.s32 5, %v649
        %v651 = vrot.slane %v611, %v650
        %653 = vbcast.lane.b32.xlu0 %v651, 256
        %v654 = vpop.permute.xlu0 %653
        %v655 = vlaneseq
        %v656 = vshrl.u32 %v655, 7
        %v657 = vsub.s32 6, %v656
        %v658 = vrot.slane %v611, %v657
        %660 = vbcast.lane.b32.xlu0 %v658, 256
        %v661 = vpop.permute.xlu0 %660
        %v662 = vlaneseq
        %v663 = vshrl.u32 %v662, 7
        %v664 = vsub.s32 7, %v663
        %v665 = vrot.slane %v611, %v664
        %667 = vbcast.lane.b32.xlu0 %v665, 256
        %v668 = vpop.permute.xlu0 %667
        %v669 = vmul.f32 %v619, %v356
        %v670 = vmul.f32 %v626, %v357
        %v671 = vmul.f32 %v633, %v358
        %v672 = vmul.f32 %v640, %v359
        %v673 = vmul.f32 %v647, %v360
        %v674 = vmul.f32 %v654, %v361
        %v675 = vmul.f32 %v661, %v362
        %v676 = vmul.f32 %v668, %v363
        %v677 = vsel %vm415, %v669, 0.0
        %v678 = vrot.slane %v677, 4
        %v679 = vadd.f32 %v677, %v678
        %v680 = vrot.slane %v679, 2
        %v681 = vadd.f32 %v679, %v680
        %v682 = vrot.slane %v681, 1
        %v683 = vadd.f32 %v681, %v682
        %v684 = vsel %vm415, %v670, 0.0
        %v685 = vrot.slane %v684, 4
        %v686 = vadd.f32 %v684, %v685
        %v687 = vrot.slane %v686, 2
        %v688 = vadd.f32 %v686, %v687
        %v689 = vrot.slane %v688, 1
        %v690 = vadd.f32 %v688, %v689
        %v691 = vsel %vm415, %v671, 0.0
        %v692 = vrot.slane %v691, 4
        %v693 = vadd.f32 %v691, %v692
        %v694 = vrot.slane %v693, 2
        %v695 = vadd.f32 %v693, %v694
        %v696 = vrot.slane %v695, 1
        %v697 = vadd.f32 %v695, %v696
        %v698 = vsel %vm415, %v672, 0.0
        %v699 = vrot.slane %v698, 4
        %v700 = vadd.f32 %v698, %v699
        %v701 = vrot.slane %v700, 2
        %v702 = vadd.f32 %v700, %v701
        %v703 = vrot.slane %v702, 1
        %v704 = vadd.f32 %v702, %v703
        %v705 = vsel %vm415, %v673, 0.0
        %v706 = vrot.slane %v705, 4
        %v707 = vadd.f32 %v705, %v706
        %v708 = vrot.slane %v707, 2
        %v709 = vadd.f32 %v707, %v708
        %v710 = vrot.slane %v709, 1
        %v711 = vadd.f32 %v709, %v710
        %v712 = vsel %vm415, %v674, 0.0
        %v713 = vrot.slane %v712, 4
        %v714 = vadd.f32 %v712, %v713
        %v715 = vrot.slane %v714, 2
        %v716 = vadd.f32 %v714, %v715
        %v717 = vrot.slane %v716, 1
        %v718 = vadd.f32 %v716, %v717
        %v719 = vsel %vm415, %v675, 0.0
        %v720 = vrot.slane %v719, 4
        %v721 = vadd.f32 %v719, %v720
        %v722 = vrot.slane %v721, 2
        %v723 = vadd.f32 %v721, %v722
        %v724 = vrot.slane %v723, 1
        %v725 = vadd.f32 %v723, %v724
        %v726 = vsel %vm415, %v676, 0.0
        %v727 = vrot.slane %v726, 4
        %v728 = vadd.f32 %v726, %v727
        %v729 = vrot.slane %v728, 2
        %v730 = vadd.f32 %v728, %v729
        %v731 = vrot.slane %v730, 1
        %v732 = vadd.f32 %v730, %v731
        %v733 = vld [vmem:[%s5] sm:$0x1]
        %v735 = vlaneseq
        %v736 = vshrl.u32 %v735, 7
        %v737 = vsub.s32 0, %v736
        %v738 = vrot.slane %v733, %v737
        %v740 = vmul.f32 %v683, %v738
        %v741 = vmul.f32 %v690, %v738
        %v742 = vmul.f32 %v697, %v738
        %v743 = vmul.f32 %v704, %v738
        %v744 = vmul.f32 %v711, %v738
        %v745 = vmul.f32 %v718, %v738
        %v746 = vmul.f32 %v725, %v738
        %v747 = vmul.f32 %v732, %v738
        %v756 = vrot.slane %v741, 7
        %v757 = vsel %vm584, %v756, %v740
        %v758 = vrot.slane %v742, 6
        %v759 = vsel %vm586, %v758, %v757
        %v760 = vrot.slane %v743, 5
        %v761 = vsel %vm588, %v760, %v759
        %v762 = vrot.slane %v744, 4
        %v763 = vsel %vm590, %v762, %v761
        %v764 = vrot.slane %v745, 3
        %v765 = vsel %vm592, %v764, %v763
        %v766 = vrot.slane %v746, 2
        %v767 = vsel %vm594, %v766, %v765
        %v768 = vrot.slane %v747, 1
        %v769 = vsel %vm596, %v768, %v767
        %v771 = vsel %vm415, %v769, 0.0
        %772 = vadd.xlane.f32.xlu0 %v771
        %v773 = vpop.xlane.xlu0 %772
        %v774 = vld [vmem:[#allocation2] sm:$0x1]
        %v776 = vlaneseq
        %v777 = vshrl.u32 %v776, 7
        %v778 = vsub.s32 0, %v777
        %v779 = vrot.slane %v774, %v778
        %v781 = vadd.f32 %v773, %v779
        %vm782 = vcmask 7168
        %783 = vst.msk [vmem:[%s354] sm:$0xff] %vm782, %v781
        %p784 = scmp.lt.s32.totalorder %s25, 1
        %s785 = scalar_select %p784, %s25, 1
        %s786 = smul.addr %s785, 8
        %s787 = scalar_lea.vmem %s7, %s786
        %p788 = scmp.lt.s32.totalorder %s25, 1
        %s789 = scalar_select %p788, %s25, 1
        %s790 = smul.addr %s789, 8
        %s791 = scalar_lea.vmem %s8, %s790
        // Predicated region
        $region53: #{tpu_custom_call.1} parent=47 // pred_check
          %p792 = pneg %p200
        $region54: #{tpu_custom_call.1} parent=47 // pred_check_branch
          %794 = sbr.rel (%p792) target = $region56
        $region55: #{tpu_custom_call.1} parent=47 // pred_region
          _
        $region56: #{tpu_custom_call.1} parent=47 // pred_fallthru
          _
        // Predicated region
        $region57: #{tpu_custom_call.1} parent=47 // pred_check
          %p795 = pneg %p226
        $region58: #{tpu_custom_call.1} parent=47 // pred_check_branch
          %797 = sbr.rel (%p795) target = $region60
        $region59: #{tpu_custom_call.1} parent=47 // pred_region
          _
        $region60: #{tpu_custom_call.1} parent=47 // pred_fallthru
          _
      $region48: #{tpu_custom_call.1} parent=5 // pred_fallthru
        _
      %p798 = scmp.le.s32.totalorder 2, %s20
      // Predicated region
      $region61: #{tpu_custom_call.1} parent=5 // pred_check
        %p799 = pneg %p798
      $region62: #{tpu_custom_call.1} parent=5 // pred_check_branch
        %801 = sbr.rel (%p799) target = $region64
      $region63: #{tpu_custom_call.1} parent=5 // pred_region
        %s802 = ssub.s32 %s20, 2
        // Predicated region
        $region65: #{tpu_custom_call.1} parent=63 // pred_check
          %p803 = pneg %p206
        $region66: #{tpu_custom_call.1} parent=63 // pred_check_branch
          %805 = sbr.rel (%p803) target = $region68
        $region67: #{tpu_custom_call.1} parent=63 // pred_region
          %p806 = scmp.lt.s32.totalorder %s26, 1
          %s807 = scalar_select %p806, %s26, 1
          %s808 = smul.addr %s807, 8
          %s809 = scalar_lea.vmem %s7, %s808
        $region68: #{tpu_custom_call.1} parent=63 // pred_fallthru
          _
        // Predicated region
        $region69: #{tpu_custom_call.1} parent=63 // pred_check
          %p810 = pneg %p232
        $region70: #{tpu_custom_call.1} parent=63 // pred_check_branch
          %812 = sbr.rel (%p810) target = $region72
        $region71: #{tpu_custom_call.1} parent=63 // pred_region
          %p813 = scmp.lt.s32.totalorder %s26, 1
          %s814 = scalar_select %p813, %s26, 1
          %s815 = smul.addr %s814, 8
          %s816 = scalar_lea.vmem %s8, %s815
        $region72: #{tpu_custom_call.1} parent=63 // pred_fallthru
          _
      $region64: #{tpu_custom_call.1} parent=5 // pred_fallthru
        _
    $region6: #{tpu_custom_call.1} parent=1 // loop_footer
      %s24 = sadd.s32 1, %s20
    $region7: #{tpu_custom_call.1} parent=1 // loop_footer_branch
      %19 = sbr.rel target = $region3
    $region8: #{tpu_custom_call.1} parent=1 // loop_exit
      _
    %817 = vsyncpa [#allocation4], 1
    %s818 = scalar_lea.sflag [#allocation4], 1
    %819 = vsyncpa %s818, 1

</llo_original>
